<compile_context>
chip_gen: v6e
topology: v6e:2x2x1
jax: 0.10.0
libtpu: 0.0.40
codegen_flags: <defaults>
</compile_context>

<pallas_src>
import functools

import jax
import jax.numpy as jnp
from jax.experimental import pallas as pl
from jax.experimental.pallas import tpu as pltpu

LANE = 128      # TPU lane width: output last dim is padded to this for dense stores
SUBLANE = 8     # f32 sublane granularity for the batch tile


def _round_up(x, m):
    return ((x + m - 1) // m) * m


def _head_kernel(x_ref, wd_ref, bd_ref, wo_ref, bo_ref, o_ref):
    # x_ref:  (TM, H)     feature tile (cast to the MXU dtype inside the kernel)
    # wd_ref: (H, H)      dense.weight^T, bf16, resident across the grid
    # bd_ref: (1, H)      dense.bias, f32
    # wo_ref: (H, LPAD)   out_proj.weight^T zero-padded to 128 lanes, bf16
    # bo_ref: (1, LPAD)   out_proj.bias zero-padded to 128 lanes, f32
    # o_ref:  (TM, LPAD)  lane-dense logits tile
    # Dropout layers are identity at inference.
    x = x_ref[...].astype(wd_ref.dtype)

    # dense (bf16 MXU inputs, f32 accumulation) + bias + tanh in f32.
    h = jnp.dot(x, wd_ref[...], preferred_element_type=jnp.float32) + bd_ref[...]
    h = jnp.tanh(h)

    # out_proj on the lane-padded weight (padded columns are zero).
    logits = jnp.dot(h.astype(wo_ref.dtype), wo_ref[...],
                     preferred_element_type=jnp.float32) + bo_ref[...]
    o_ref[...] = logits.astype(o_ref.dtype)


def prepare_head_params(wd, bd, wo, bo, *, compute_dtype=jnp.bfloat16):
    """One-time (model-load) conversion to MXU-ready layout.

    In  (PyTorch Linear layout): wd (H, H), bd (H,), wo (L, H), bo (L,).
    Out: wd_t (H, H) compute_dtype, bd2 (1, H) f32,
         wo_t (H, LPAD) compute_dtype zero-padded, bo2 (1, LPAD) f32 zero-padded.
    """
    H = wd.shape[1]
    L = wo.shape[0]
    l_pad = _round_up(max(L, LANE), LANE)
    wd_t = wd.T.astype(compute_dtype)                                        # (H, H)
    wo_t = jnp.zeros((H, l_pad), compute_dtype).at[:, :L].set(
        wo.T.astype(compute_dtype))                                          # (H, LPAD)
    bd2 = bd.reshape(1, H).astype(jnp.float32)                               # (1, H)
    bo2 = jnp.zeros((1, l_pad), jnp.float32).at[:, :L].set(
        bo.astype(jnp.float32))                                              # (1, LPAD)
    return wd_t, bd2, wo_t, bo2


@functools.partial(jax.jit, static_argnames=("num_labels", "max_block_m"))
def hubert_classification_head(features, wd_t, bd2, wo_t, bo2, *,
                               num_labels, max_block_m=256):
    """features: (B, H) -> logits (B, num_labels). Params from prepare_head_params().

    max_block_m: MXU-sized batch tile cap; 256 suits v6e/v7x, use 128 on v5e.
    """
    B, H = features.shape
    l_pad = wo_t.shape[1]

    # Batch tiling: one block for small batches (grid=(1,): no pipeline overhead,
    # weights DMA'd exactly once), MXU-sized tiles otherwise.
    if B <= max_block_m:
        block_m = _round_up(B, SUBLANE)
        b_pad = block_m
    else:
        block_m = max_block_m
        b_pad = _round_up(B, block_m)

    x = features
    if b_pad != B:
        x = jnp.pad(x, ((0, b_pad - B), (0, 0)))

    grid = (b_pad // block_m,)
    out = pl.pallas_call(
        _head_kernel,
        out_shape=jax.ShapeDtypeStruct((b_pad, l_pad), features.dtype),
        grid_spec=pltpu.PrefetchScalarGridSpec(
            num_scalar_prefetch=0,
            grid=grid,
            in_specs=[
                pl.BlockSpec((block_m, H), lambda i: (i, 0)),   # feature tile
                pl.BlockSpec((H, H), lambda i: (0, 0)),         # dense weight (resident)
                pl.BlockSpec((1, H), lambda i: (0, 0)),         # dense bias
                pl.BlockSpec((H, l_pad), lambda i: (0, 0)),     # out_proj weight (resident)
                pl.BlockSpec((1, l_pad), lambda i: (0, 0)),     # out_proj bias
            ],
            out_specs=pl.BlockSpec((block_m, l_pad), lambda i: (i, 0)),
        ),
        compiler_params=pltpu.CompilerParams(
            # Batch tiles are independent -> sharded across TensorCores on v7x
            # when the grid has >= 2 steps.
            dimension_semantics=("parallel",),
            vmem_limit_bytes=32 * 1024 * 1024,
        ),
    )(x, wd_t, bd2, wo_t, bo2)

    # Drop batch padding and the lane padding of the logits.
    return out[:B, :num_labels]


def _reference(features, wd, bd, wo, bo):
    h = jnp.tanh(features @ wd.T + bd)
    return h @ wo.T + bo


if __name__ == "__main__":
    # Small config consistent with the module: hidden_size=32, num_labels=4, batch=8.
    B, H, L = 8, 32, 4

    key = jax.random.PRNGKey(0)
    k_x, k_wd, k_bd, k_wo, k_bo = jax.random.split(key, 5)

    features = jax.random.normal(k_x, (B, H), dtype=jnp.float32)
    # PyTorch Linear layout: weight (out, in), bias (out,)
    wd = jax.random.normal(k_wd, (H, H), dtype=jnp.float32) * 0.1
    bd = jax.random.normal(k_bd, (H,), dtype=jnp.float32) * 0.1
    wo = jax.random.normal(k_wo, (L, H), dtype=jnp.float32) * 0.1
    bo = jax.random.normal(k_bo, (L,), dtype=jnp.float32) * 0.1

    # TODO(synk): dropout is identity at inference; training-mode dropout (RNG mask) not implemented.
    params = prepare_head_params(wd, bd, wo, bo)          # one-time, MXU-ready layout
    out = hubert_classification_head(features, *params, num_labels=L)
    out = jax.block_until_ready(out)

    ref = _reference(features, wd, bd, wo, bo)
    assert out.shape == (B, L)
    # bf16 MXU inputs with f32 accumulation: compare to the f32 reference at bf16 tolerance.
    assert jnp.allclose(out, ref, atol=2e-2, rtol=2e-2), "mismatch vs reference"

    print("KERNEL_OK")
</pallas_src>

<mosaic_0001>
module attributes {stable_mosaic.version = 11 : i64} {
  func.func @_head_kernel(%arg0: i32, %arg1: memref<8x32xf32, #tpu.memory_space<vmem>>, %arg2: memref<32x32xbf16, #tpu.memory_space<vmem>>, %arg3: memref<1x32xf32, #tpu.memory_space<vmem>>, %arg4: memref<32x128xbf16, #tpu.memory_space<vmem>>, %arg5: memref<1x128xf32, #tpu.memory_space<vmem>>, %arg6: memref<8x128xf32, #tpu.memory_space<vmem>>) attributes {dimension_semantics = [#tpu.dimension_semantics<parallel>], iteration_bounds = array<i64: 1>, scalar_prefetch = 0 : i64, scratch_operands = 0 : i64, tpu.core_type = #tpu.core_type<tc>, window_params = [{transform_indices = @transform_0, window_bounds = array<i64: 8, 32>}, {pipeline_mode = #tpu.pipeline_mode<synchronous>, transform_indices = @transform_1, window_bounds = array<i64: 32, 32>}, {pipeline_mode = #tpu.pipeline_mode<synchronous>, transform_indices = @transform_2, window_bounds = array<i64: 1, 32>}, {pipeline_mode = #tpu.pipeline_mode<synchronous>, transform_indices = @transform_3, window_bounds = array<i64: 32, 128>}, {pipeline_mode = #tpu.pipeline_mode<synchronous>, transform_indices = @transform_4, window_bounds = array<i64: 1, 128>}, {transform_indices = @transform_5, window_bounds = array<i64: 8, 128>}]} {
    %c0 = arith.constant 0 : index
    %c0_0 = arith.constant 0 : index
    %0 = vector.load %arg1[%c0, %c0_0] : memref<8x32xf32, #tpu.memory_space<vmem>>, vector<8x32xf32>
    %1 = arith.truncf %0 : vector<8x32xf32> to vector<8x32xbf16>
    %c0_1 = arith.constant 0 : index
    %c0_2 = arith.constant 0 : index
    %2 = vector.load %arg2[%c0_1, %c0_2] : memref<32x32xbf16, #tpu.memory_space<vmem>>, vector<32x32xbf16>
    %cst = arith.constant dense<0.000000e+00> : vector<8x32xf32>
    %3 = tpu.matmul %1, %2, %cst {dimension_numbers = #tpu.dot_dimension_numbers<[1], [0], [0], [1], [0, 0, 1, 1], [], []>} : vector<8x32xbf16>, vector<32x32xbf16>, vector<8x32xf32> -> vector<8x32xf32>
    %c0_3 = arith.constant 0 : index
    %c0_4 = arith.constant 0 : index
    %4 = vector.load %arg3[%c0_3, %c0_4] : memref<1x32xf32, #tpu.memory_space<vmem>>, vector<1x32xf32>
    %5 = vector.broadcast %4 : vector<1x32xf32> to vector<8x32xf32>
    %6 = arith.addf %3, %5 : vector<8x32xf32>
    %7 = math.tanh %6 : vector<8x32xf32>
    %8 = arith.truncf %7 : vector<8x32xf32> to vector<8x32xbf16>
    %c0_5 = arith.constant 0 : index
    %c0_6 = arith.constant 0 : index
    %9 = vector.load %arg4[%c0_5, %c0_6] : memref<32x128xbf16, #tpu.memory_space<vmem>>, vector<32x128xbf16>
    %cst_7 = arith.constant dense<0.000000e+00> : vector<8x128xf32>
    %10 = tpu.matmul %8, %9, %cst_7 {dimension_numbers = #tpu.dot_dimension_numbers<[1], [0], [0], [1], [0, 0, 1, 1], [], []>} : vector<8x32xbf16>, vector<32x128xbf16>, vector<8x128xf32> -> vector<8x128xf32>
    %c0_8 = arith.constant 0 : index
    %c0_9 = arith.constant 0 : index
    %11 = vector.load %arg5[%c0_8, %c0_9] : memref<1x128xf32, #tpu.memory_space<vmem>>, vector<1x128xf32>
    %12 = vector.broadcast %11 : vector<1x128xf32> to vector<8x128xf32>
    %13 = arith.addf %10, %12 : vector<8x128xf32>
    %c0_10 = arith.constant 0 : index
    %c0_11 = arith.constant 0 : index
    %14 = vector.load %arg6[%c0_10, %c0_11] : memref<8x128xf32, #tpu.memory_space<vmem>>, vector<8x128xf32>
    tpu.vector_store %arg6[%c0_10, %c0_11], %13 {strides = array<i32>} : memref<8x128xf32, #tpu.memory_space<vmem>>, vector<8x128xf32>,
    return
  }
  func.func @transform_0(%arg0: i32) -> (i32, i32) {
    %c0_i32 = arith.constant 0 : i32
    %c0_i32_0 = arith.constant 0 : i32
    return %arg0, %c0_i32 : i32, i32
  }
  func.func @transform_1(%arg0: i32) -> (i32, i32) {
    %c0_i32 = arith.constant 0 : i32
    %c0_i32_0 = arith.constant 0 : i32
    %c0_i32_1 = arith.constant 0 : i32
    return %c0_i32, %c0_i32_0 : i32, i32
  }
  func.func @transform_2(%arg0: i32) -> (i32, i32) {
    %c0_i32 = arith.constant 0 : i32
    %c0_i32_0 = arith.constant 0 : i32
    %c0_i32_1 = arith.constant 0 : i32
    return %c0_i32, %c0_i32_0 : i32, i32
  }
  func.func @transform_3(%arg0: i32) -> (i32, i32) {
    %c0_i32 = arith.constant 0 : i32
    %c0_i32_0 = arith.constant 0 : i32
    %c0_i32_1 = arith.constant 0 : i32
    return %c0_i32, %c0_i32_0 : i32, i32
  }
  func.func @transform_4(%arg0: i32) -> (i32, i32) {
    %c0_i32 = arith.constant 0 : i32
    %c0_i32_0 = arith.constant 0 : i32
    %c0_i32_1 = arith.constant 0 : i32
    return %c0_i32, %c0_i32_0 : i32, i32
  }
  func.func @transform_5(%arg0: i32) -> (i32, i32) {
    %c0_i32 = arith.constant 0 : i32
    %c0_i32_0 = arith.constant 0 : i32
    return %arg0, %c0_i32 : i32, i32
  }
}

</mosaic_0001>

<llo_original>
// kernel: hubert_classification_head.1
$region0: #{hubert_classification_head.1}
  #allocation0 [shape = 'u32[]', space=smem, size = 0x4, offset = 0x4, fixed_abs, tag = 'smem constant byte address 0x4 - core index']
  #allocation1 [shape = 'u32[144,128]{1,0:T(1,128)}', space=vmem, size = 0x12000, scoped, tag = 'internal scratch']
  %s0 = inlined_call_operand.hbm [shape: f32[8,32], index: 0, kind: input, shape index: {}]
  %s1 = inlined_call_operand.hbm [shape: bf16[32,32], index: 1, kind: input, shape index: {}]
  %s2 = inlined_call_operand.vmem [shape: f32[1,32], index: 2, kind: input, shape index: {}]
  %s3 = inlined_call_operand.hbm [shape: bf16[32,128], index: 3, kind: input, shape index: {}]
  %s4 = inlined_call_operand.vmem [shape: f32[1,128], index: 4, kind: input, shape index: {}]
  %s5 = inlined_call_operand.vmem [shape: f32[8,128], index: 5, kind: output, shape index: {}]
  %s6 = sld [smem:[#allocation0]]
  $region42: #{hubert_classification_head.1} parent=0
    _
  %s8 = ssub.s32 1, %s6
  %s9 = scalar_select 0, %s8, %s6
  $region1: #{hubert_classification_head.1} parent=0
    #allocation2 [shape = 'u8[4096]{0}', space=vmem, size = 0x1000, scoped, tag = 'input window, operand 0, single buffered']
    #allocation3 [shape = 's32[1]{0}', space=sflag, size = 0x4, scoped, tag = 'scoped memory for hubert_classification_head.1']
    #allocation4 [shape = 'u8[8192]{0}', space=vmem, size = 0x2000, scoped, tag = 'input window, operand 1, single buffered']
    #allocation5 [shape = 's32[1]{0}', space=sflag, size = 0x4, scoped, tag = 'scoped memory for hubert_classification_head.1']
    #allocation6 [shape = 'u8[8192]{0}', space=vmem, size = 0x2000, scoped, tag = 'input window, operand 3, single buffered']
    %10 = vsyncpa [#allocation3], 0
    %11 = vsyncpa [#allocation5], 0
    // Predicated region
    $region2: #{hubert_classification_head.1} parent=1 // pred_check
      _
    $region3: #{hubert_classification_head.1} parent=1 // pred_check_branch
      %13 = sbr.rel (0) target = $region5
    $region4: #{hubert_classification_head.1} parent=1 // pred_region
      %s15 = ssub.s32 128, 128
      %16 = vsyncadd [#allocation3], %s15
      %s18 = sshll.u32 [#allocation2], 4
      %s19 = int_to_ptr.vmem [resolvable:$true] %s18
      %21 = dma.hbm_to_vmem [thread:$0]  %s0, 128, %s19, [#allocation3]
    $region5: #{hubert_classification_head.1} parent=1 // pred_fallthru
      _
    // Predicated region
    $region6: #{hubert_classification_head.1} parent=1 // pred_check
      _
    $region7: #{hubert_classification_head.1} parent=1 // pred_check_branch
      %23 = sbr.rel (0) target = $region9
    $region8: #{hubert_classification_head.1} parent=1 // pred_region
      %s25 = ssub.s32 256, 256
      %26 = vsyncadd [#allocation5], %s25
      %s27 = sshll.u32 [#allocation4], 4
      %s28 = int_to_ptr.vmem [resolvable:$true] %s27
      %33 = dma.hbm_to_vmem [thread:$0]  %s1, 256, %s28, [#allocation5], 64, 64, 4
    $region9: #{hubert_classification_head.1} parent=1 // pred_fallthru
      _
    // Predicated region
    $region10: #{hubert_classification_head.1} parent=1 // pred_check
      _
    $region11: #{hubert_classification_head.1} parent=1 // pred_check_branch
      %35 = sbr.rel (0) target = $region13
    $region12: #{hubert_classification_head.1} parent=1 // pred_region
      _
    $region13: #{hubert_classification_head.1} parent=1 // pred_fallthru
      _
    // Predicated region
    $region14: #{hubert_classification_head.1} parent=1 // pred_check
      _
    $region15: #{hubert_classification_head.1} parent=1 // pred_check_branch
      %37 = sbr.rel (0) target = $region17
    $region16: #{hubert_classification_head.1} parent=1 // pred_region
      %s39 = ssub.s32 256, 256
      %40 = vsyncadd [#allocation5], %s39
      %s41 = sshll.u32 [#allocation6], 4
      %s42 = int_to_ptr.vmem [resolvable:$true] %s41
      %47 = dma.hbm_to_vmem [thread:$0]  %s3, 256, %s42, [#allocation5], 64, 64, 4
    $region17: #{hubert_classification_head.1} parent=1 // pred_fallthru
      _
    // Predicated region
    $region18: #{hubert_classification_head.1} parent=1 // pred_check
      _
    $region19: #{hubert_classification_head.1} parent=1 // pred_check_branch
      %49 = sbr.rel (0) target = $region21
    $region20: #{hubert_classification_head.1} parent=1 // pred_region
      _
    $region21: #{hubert_classification_head.1} parent=1 // pred_fallthru
      _
    // Predicated region
    $region22: #{hubert_classification_head.1} parent=1 // pred_check
      _
    $region23: #{hubert_classification_head.1} parent=1 // pred_check_branch
      %51 = sbr.rel (0) target = $region25
    $region24: #{hubert_classification_head.1} parent=1 // pred_region
      %52 = dma.done [#allocation3], 128
    $region25: #{hubert_classification_head.1} parent=1 // pred_fallthru
      _
    // Predicated region
    $region26: #{hubert_classification_head.1} parent=1 // pred_check
      _
    $region27: #{hubert_classification_head.1} parent=1 // pred_check_branch
      %54 = sbr.rel (0) target = $region29
    $region28: #{hubert_classification_head.1} parent=1 // pred_region
      %55 = dma.done [#allocation5], 256
    $region29: #{hubert_classification_head.1} parent=1 // pred_fallthru
      _
    // Predicated region
    $region30: #{hubert_classification_head.1} parent=1 // pred_check
      _
    $region31: #{hubert_classification_head.1} parent=1 // pred_check_branch
      %57 = sbr.rel (0) target = $region33
    $region32: #{hubert_classification_head.1} parent=1 // pred_region
      %58 = dma.done [#allocation5], 256
    $region33: #{hubert_classification_head.1} parent=1 // pred_fallthru
      _
    %v60 = vld [vmem:[#allocation2] sm:$0xff]
    %v61 = vpack.c.bf16 %v60, %v60
    %v62 = vld [vmem:[#allocation4] sm:$0xf]
    %v63 = vld [vmem:[#allocation4 + $0x4] sm:$0xf]
    %v64 = vld [vmem:[#allocation4 + $0x8] sm:$0xf]
    %v65 = vld [vmem:[#allocation4 + $0xc] sm:$0xf]
    %v66 = vld [vmem:[%s2] sm:$0x1]
    %v68 = vlaneseq
    %v69 = vshrl.u32 %v68, 7
    %v70 = vsub.s32 0, %v69
    %v71 = vrot.slane %v66, %v70
    %v77 = vunpack.c.l.b16 %v62
    %v78 = vunpack.c.l.b16 %v63
    %v79 = vunpack.c.l.b16 %v64
    %v80 = vunpack.c.l.b16 %v65
    %v81 = vpack.c.b16 %v78, %v77
    %v82 = vpack.c.b16 %v80, %v79
    %vm85 = vcmask 261120
    %v87 = vsel %vm85, %v61, 0
    %89 = vmatprep.subr.bf16.mxu0 0
    %90 = vmatpush1.bf16.msra.mxu0 0
    %91 = vmatprep.subr.bf16.mxu0 0
    %92 = vmatpush1.bf16.msra.mxu0 0
    %93 = vmatprep.subr.bf16.mxu0 0
    %94 = vmatpush1.bf16.msra.mxu0 0
    %95 = vmatprep.subr.bf16.mxu0 0
    %96 = vmatpush1.bf16.msra.mxu0 0
    %97 = vmatprep.subr.bf16.mxu0 0
    %98 = vmatpush1.bf16.msra.mxu0 0
    %99 = vmatprep.subr.bf16.mxu0 0
    %100 = vmatpush1.bf16.msra.mxu0 0
    %101 = vmatprep.subr.bf16.mxu0 0
    %102 = vmatpush1.bf16.msra.mxu0 %v82
    %103 = vmatprep.subr.bf16.mxu0 0
    %104 = vmatpush1.bf16.msra.mxu0 %v81
    %105 = vmatprep.subr.bf16.mxu0 0
    %106 = vmatpush2.bf16.msra.mxu0 0
    %107 = vmatprep.subr.bf16.mxu0 0
    %108 = vmatpush2.bf16.msra.mxu0 0
    %109 = vmatprep.subr.bf16.mxu0 0
    %110 = vmatpush2.bf16.msra.mxu0 0
    %111 = vmatprep.subr.bf16.mxu0 0
    %112 = vmatpush2.bf16.msra.mxu0 0
    %113 = vmatprep.subr.bf16.mxu0 0
    %114 = vmatpush2.bf16.msra.mxu0 0
    %115 = vmatprep.subr.bf16.mxu0 0
    %116 = vmatpush2.bf16.msra.mxu0 0
    %117 = vmatprep.subr.bf16.mxu0 0
    %118 = vmatpush2.bf16.msra.mxu0 0
    %119 = vmatprep.subr.bf16.mxu0 0
    %120 = vmatpush2.bf16.msra.mxu0 0
    %121 = vmatprep.mubr.bf16.mxu0 0
    %122 = vmatmul.mubr.bf16.gmra.mxu0 %v87
    %v123 = vpop.f32.mrf.mxu0
    %v124 = vadd.f32 %v71, %v123
    %v125 = vpop.f32.mrf.mxu0
    %v126 = vpop.f32.mrf.mxu0
    %v127 = vpop.f32.mrf.mxu0
    %128 = vdwg.mxu0
    %v129 = vtanh.pop %v124
    %v130 = vpack.c.bf16 %v129, %v129
    %v131 = vld [vmem:[#allocation6] sm:$0xf]
    %v132 = vld [vmem:[#allocation6 + $0x4] sm:$0xf]
    %v133 = vld [vmem:[#allocation6 + $0x8] sm:$0xf]
    %v134 = vld [vmem:[#allocation6 + $0xc] sm:$0xf]
    %v135 = vld [vmem:[%s4] sm:$0x1]
    %v137 = vlaneseq
    %v138 = vshrl.u32 %v137, 7
    %v139 = vsub.s32 0, %v138
    %v140 = vrot.slane %v135, %v139
    %v146 = vunpack.c.l.b16 %v131
    %v147 = vunpack.c.l.b16 %v132
    %v148 = vunpack.c.l.b16 %v133
    %v149 = vunpack.c.l.b16 %v134
    %v150 = vpack.c.b16 %v147, %v146
    %v151 = vpack.c.b16 %v149, %v148
    %v155 = vsel %vm85, %v130, 0
    %157 = vmatprep.subr.bf16.mxu0 0
    %158 = vmatpush1.bf16.msra.mxu0 0
    %159 = vmatprep.subr.bf16.mxu0 0
    %160 = vmatpush1.bf16.msra.mxu0 0
    %161 = vmatprep.subr.bf16.mxu0 0
    %162 = vmatpush1.bf16.msra.mxu0 0
    %163 = vmatprep.subr.bf16.mxu0 0
    %164 = vmatpush1.bf16.msra.mxu0 0
    %165 = vmatprep.subr.bf16.mxu0 0
    %166 = vmatpush1.bf16.msra.mxu0 0
    %167 = vmatprep.subr.bf16.mxu0 0
    %168 = vmatpush1.bf16.msra.mxu0 0
    %169 = vmatprep.subr.bf16.mxu0 0
    %170 = vmatpush1.bf16.msra.mxu0 %v151
    %171 = vmatprep.subr.bf16.mxu0 0
    %172 = vmatpush1.bf16.msra.mxu0 %v150
    %173 = vmatprep.subr.bf16.mxu0 0
    %174 = vmatpush2.bf16.msra.mxu0 0
    %175 = vmatprep.subr.bf16.mxu0 0
    %176 = vmatpush2.bf16.msra.mxu0 0
    %177 = vmatprep.subr.bf16.mxu0 0
    %178 = vmatpush2.bf16.msra.mxu0 0
    %179 = vmatprep.subr.bf16.mxu0 0
    %180 = vmatpush2.bf16.msra.mxu0 0
    %181 = vmatprep.subr.bf16.mxu0 0
    %182 = vmatpush2.bf16.msra.mxu0 0
    %183 = vmatprep.subr.bf16.mxu0 0
    %184 = vmatpush2.bf16.msra.mxu0 0
    %185 = vmatprep.subr.bf16.mxu0 0
    %186 = vmatpush2.bf16.msra.mxu0 0
    %187 = vmatprep.subr.bf16.mxu0 0
    %188 = vmatpush2.bf16.msra.mxu0 0
    %189 = vmatprep.mubr.bf16.mxu0 0
    %190 = vmatmul.mubr.bf16.gmra.mxu0 %v155
    %v191 = vpop.f32.mrf.mxu0
    %v192 = vadd.f32 %v140, %v191
    %v193 = vpop.f32.mrf.mxu0
    %v194 = vpop.f32.mrf.mxu0
    %v195 = vpop.f32.mrf.mxu0
    %196 = vdwg.mxu0
    %197 = vst [vmem:[%s5] sm:$0xff] %v192
    // Predicated region
    $region34: #{hubert_classification_head.1} parent=1 // pred_check
      _
    $region35: #{hubert_classification_head.1} parent=1 // pred_check_branch
      %199 = sbr.rel (0) target = $region37
    $region36: #{hubert_classification_head.1} parent=1 // pred_region
      _
    $region37: #{hubert_classification_head.1} parent=1 // pred_fallthru
      _
    // Predicated region
    $region38: #{hubert_classification_head.1} parent=1 // pred_check
      _
    $region39: #{hubert_classification_head.1} parent=1 // pred_check_branch
      %201 = sbr.rel (0) target = $region41
    $region40: #{hubert_classification_head.1} parent=1 // pred_region
      _
    $region41: #{hubert_classification_head.1} parent=1 // pred_fallthru
      _
    %202 = vsyncpa [#allocation3], 1
    %203 = vsyncpa [#allocation5], 1

</llo_original>
